<compile_context>
chip_gen: v7x
topology: tpu7x:2x2x1
jax: 0.10.0
libtpu: 0.0.40
codegen_flags: <defaults>
</compile_context>

<pallas_src>
import functools

import jax
import jax.numpy as jnp
from jax.experimental import pallas as pl
from jax.experimental.pallas import tpu as pltpu

GAMMA = 2.0
ALPHA = (0.5, 0.5)
N_CLASS = 2
CLAMP_MIN = 1e-6
CLAMP_MAX = 0.999999
LANES = 128
MAX_TILE_ROWS = 2048  # 2048 rows * 128 lanes * 4B = 1 MiB per class per block


def _pow_gamma(w, gamma):
    # gamma == 2 is the module default; w*w stays on the VPU (no exp/log).
    if gamma == 2 or gamma == 2.0:
        return w * w
    if gamma == 1 or gamma == 1.0:
        return w
    return w ** gamma


def focal_loss_kernel(x_ref, t_ref, o_ref, *, n_class, gamma, alpha):
    # x_ref: (C, TR, 128) logits for this pixel tile
    # t_ref: (TR, 128)    int32 targets; padded pixels carry -1
    # o_ref: (1, 128)     per-tile, per-lane partial sums
    t = t_ref[...]

    if n_class == 2:
        # softmax over 2 classes == sigmoid of the logit difference.
        x0 = x_ref[0].astype(jnp.float32)
        x1 = x_ref[1].astype(jnp.float32)
        pt0 = 1.0 / (1.0 + jnp.exp(x1 - x0))             # p(class 0)
        pt_t = jnp.where(t == 0, pt0, 1.0 - pt0)         # p(target class)
        pt_t = jnp.clip(pt_t, CLAMP_MIN, CLAMP_MAX)
        alpha_t = jnp.where(t == 0, alpha[0], alpha[1])
        valid = jnp.logical_and(t >= 0, t < n_class).astype(jnp.float32)
        w = 1.0 - pt_t
        loss = -alpha_t * _pow_gamma(w, gamma) * jnp.log(pt_t) * valid
    else:
        # Generic path (static Python loop over classes; channel axis is a leading dim).
        xs = [x_ref[i].astype(jnp.float32) for i in range(n_class)]
        m = xs[0]
        for xi in xs[1:]:
            m = jnp.maximum(m, xi)
        es = [jnp.exp(xi - m) for xi in xs]
        denom = es[0]
        for e in es[1:]:
            denom = denom + e
        inv_denom = pl.reciprocal(denom, approx=False)
        loss = jnp.zeros_like(m)
        for i in range(n_class):
            pt_i = jnp.clip(es[i] * inv_denom, CLAMP_MIN, CLAMP_MAX)
            onehot_i = (t == i).astype(jnp.float32)
            w = 1.0 - pt_i
            loss = loss - alpha[i] * _pow_gamma(w, gamma) * onehot_i * jnp.log(pt_i)

    # Only a cheap sublane reduce per tile; cross-lane + cross-tile reduction is done
    # outside the kernel on the tiny (num_tiles, 128) partial-sum array.
    o_ref[...] = jnp.sum(loss, axis=0, keepdims=True)


def focal_loss(x, target, *, gamma=GAMMA, alpha=ALPHA, n_class=N_CLASS, tile_rows=None):
    N, C, H, W = x.shape
    assert C == n_class
    assert target.shape == (N, H, W)

    M = N * H * W
    R = (M + LANES - 1) // LANES                     # rows of 128 pixels

    if tile_rows is None:
        tile_rows = min(((R + 7) // 8) * 8, MAX_TILE_ROWS)
    assert tile_rows % 8 == 0
    R_pad = ((R + tile_rows - 1) // tile_rows) * tile_rows
    M_pad = R_pad * LANES
    num_tiles = R_pad // tile_rows

    # Lane-dense layout: (C, rows, 128) logits and (rows, 128) targets.
    x_flat = jnp.transpose(x, (1, 0, 2, 3)).reshape(C, M)
    x_flat = jnp.pad(x_flat, ((0, 0), (0, M_pad - M)))
    x_flat = x_flat.reshape(C, R_pad, LANES)

    t_flat = target.reshape(M).astype(jnp.int32)
    t_flat = jnp.pad(t_flat, (0, M_pad - M), constant_values=-1)  # -1 => ignored
    t_flat = t_flat.reshape(R_pad, LANES)

    kernel = functools.partial(
        focal_loss_kernel, n_class=n_class, gamma=gamma, alpha=tuple(alpha)
    )

    partial_sums = pl.pallas_call(
        kernel,
        out_shape=jax.ShapeDtypeStruct((num_tiles, LANES), jnp.float32),
        grid_spec=pltpu.PrefetchScalarGridSpec(
            num_scalar_prefetch=0,
            grid=(num_tiles,),
            in_specs=[
                pl.BlockSpec((C, tile_rows, LANES), lambda i: (0, i, 0)),
                pl.BlockSpec((tile_rows, LANES), lambda i: (i, 0)),
            ],
            out_specs=pl.BlockSpec((1, LANES), lambda i: (i, 0)),
        ),
        compiler_params=pltpu.CompilerParams(
            # Each tile writes its own output block -> fully parallel (uses both TCs on v7x).
            dimension_semantics=("parallel",),
        ),
    )(x_flat, t_flat)

    # reduction == 'mean': final cross-tile/cross-lane sum + mean in plain JAX.
    return jnp.sum(partial_sums) / jnp.float32(M)


def focal_loss_ref(x, target, *, gamma=GAMMA, alpha=ALPHA, n_class=N_CLASS):
    """Plain-JAX reference matching the PyTorch forward."""
    pt = jax.nn.softmax(x.astype(jnp.float32), axis=1)
    pt = jnp.clip(pt, CLAMP_MIN, CLAMP_MAX)
    loss = 0.0
    for i in range(n_class):
        onehot_i = (target == i).astype(jnp.float32)
        loss = loss - alpha[i] * (1.0 - pt[:, i]) ** gamma * onehot_i * jnp.log(pt[:, i])
    return jnp.mean(loss)


if __name__ == "__main__":
    key = jax.random.PRNGKey(0)

    # Test 1: toy shape (single grid step, padded up to one 8x128-row tile).
    kx, kt = jax.random.split(key)
    N, C, H, W = 2, N_CLASS, 16, 16
    x = jax.random.normal(kx, (N, C, H, W), dtype=jnp.float32)
    target = jax.random.randint(kt, (N, H, W), 0, N_CLASS, dtype=jnp.int32)

    out = jax.block_until_ready(focal_loss(x, target))
    ref = focal_loss_ref(x, target)
    assert jnp.allclose(out, ref, rtol=1e-5, atol=1e-6), (out, ref)

    # Test 2: exercise a multi-tile parallel grid + ragged padding (tile_rows override).
    kx2, kt2 = jax.random.split(jax.random.PRNGKey(1))
    N2, H2, W2 = 2, 40, 40  # M = 3200 pixels -> 25 rows -> 4 tiles of 8 rows (7 padded)
    x2 = jax.random.normal(kx2, (N2, C, H2, W2), dtype=jnp.float32)
    t2 = jax.random.randint(kt2, (N2, H2, W2), 0, N_CLASS, dtype=jnp.int32)

    out2 = jax.block_until_ready(focal_loss(x2, t2, tile_rows=8))
    ref2 = focal_loss_ref(x2, t2)
    assert jnp.allclose(out2, ref2, rtol=1e-5, atol=1e-6), (out2, ref2)

    print("KERNEL_OK")
</pallas_src>

<mosaic_0001>
module attributes {stable_mosaic.version = 11 : i64} {
  func.func @focal_loss_kernel(%arg0: i32, %arg1: memref<2x8x128xf32, #tpu.memory_space<vmem>>, %arg2: memref<8x128xi32, #tpu.memory_space<vmem>>, %arg3: memref<1x128xf32, #tpu.memory_space<vmem>>) attributes {dimension_semantics = [#tpu.dimension_semantics<parallel>], iteration_bounds = array<i64: 1>, scalar_prefetch = 0 : i64, scratch_operands = 0 : i64, tpu.core_type = #tpu.core_type<tc>, window_params = [{transform_indices = @transform_0, window_bounds = array<i64: 2, 8, 128>}, {transform_indices = @transform_1, window_bounds = array<i64: 8, 128>}, {transform_indices = @transform_2, window_bounds = array<i64: 1, 128>}]} {
    %c0 = arith.constant 0 : index
    %c0_0 = arith.constant 0 : index
    %0 = vector.load %arg2[%c0, %c0_0] : memref<8x128xi32, #tpu.memory_space<vmem>>, vector<8x128xi32>
    %c0_1 = arith.constant 0 : index
    %c0_2 = arith.constant 0 : index
    %c0_3 = arith.constant 0 : index
    %1 = vector.load %arg1[%c0_1, %c0_2, %c0_3] : memref<2x8x128xf32, #tpu.memory_space<vmem>>, vector<1x8x128xf32>
    %2 = vector.shape_cast %1 : vector<1x8x128xf32> to vector<8x128xf32>
    %c1 = arith.constant 1 : index
    %c0_4 = arith.constant 0 : index
    %c0_5 = arith.constant 0 : index
    %3 = vector.load %arg1[%c1, %c0_4, %c0_5] : memref<2x8x128xf32, #tpu.memory_space<vmem>>, vector<1x8x128xf32>
    %4 = vector.shape_cast %3 : vector<1x8x128xf32> to vector<8x128xf32>
    %5 = arith.subf %4, %2 : vector<8x128xf32>
    %6 = math.exp %5 : vector<8x128xf32>
    %cst = arith.constant 1.000000e+00 : f32
    %7 = vector.broadcast %cst : f32 to vector<8x128xf32>
    %8 = arith.addf %7, %6 : vector<8x128xf32>
    %cst_6 = arith.constant 1.000000e+00 : f32
    %9 = vector.broadcast %cst_6 : f32 to vector<8x128xf32>
    %10 = arith.divf %9, %8 : vector<8x128xf32>
    %c0_i32 = arith.constant 0 : i32
    %11 = vector.broadcast %c0_i32 : i32 to vector<8x128xi32>
    %12 = arith.cmpi eq, %0, %11 : vector<8x128xi32>
    %cst_7 = arith.constant 1.000000e+00 : f32
    %13 = vector.broadcast %cst_7 : f32 to vector<8x128xf32>
    %14 = arith.subf %13, %10 : vector<8x128xf32>
    %15 = arith.select %12, %10, %14 : vector<8x128xi1>, vector<8x128xf32>
    %cst_8 = arith.constant 9.99999997E-7 : f32
    %cst_9 = arith.constant 0.999998986 : f32
    %16 = vector.broadcast %cst_8 : f32 to vector<8x128xf32>
    %17 = arith.maximumf %16, %15 : vector<8x128xf32>
    %18 = vector.broadcast %cst_9 : f32 to vector<8x128xf32>
    %19 = arith.minimumf %18, %17 : vector<8x128xf32>
    %c0_i32_10 = arith.constant 0 : i32
    %20 = vector.broadcast %c0_i32_10 : i32 to vector<8x128xi32>
    %21 = arith.cmpi eq, %0, %20 : vector<8x128xi32>
    %cst_11 = arith.constant 5.000000e-01 : f32
    %cst_12 = arith.constant 5.000000e-01 : f32
    %22 = vector.broadcast %cst_11 : f32 to vector<8x128xf32>
    %23 = vector.broadcast %cst_12 : f32 to vector<8x128xf32>
    %24 = arith.select %21, %22, %23 : vector<8x128xi1>, vector<8x128xf32>
    %c0_i32_13 = arith.constant 0 : i32
    %25 = vector.broadcast %c0_i32_13 : i32 to vector<8x128xi32>
    %26 = arith.cmpi sge, %0, %25 : vector<8x128xi32>
    %c2_i32 = arith.constant 2 : i32
    %27 = vector.broadcast %c2_i32 : i32 to vector<8x128xi32>
    %28 = arith.cmpi slt, %0, %27 : vector<8x128xi32>
    %29 = arith.andi %26, %28 : vector<8x128xi1>
    %30 = arith.extui %29 : vector<8x128xi1> to vector<8x128xi32>
    %31 = arith.sitofp %30 : vector<8x128xi32> to vector<8x128xf32>
    %cst_14 = arith.constant 1.000000e+00 : f32
    %32 = vector.broadcast %cst_14 : f32 to vector<8x128xf32>
    %33 = arith.subf %32, %19 : vector<8x128xf32>
    %cst_15 = arith.constant 0.000000e+00 : f32
    %34 = vector.broadcast %cst_15 : f32 to vector<8x128xf32>
    %35 = arith.subf %34, %24 : vector<8x128xf32>
    %36 = arith.mulf %33, %33 : vector<8x128xf32>
    %37 = arith.mulf %35, %36 : vector<8x128xf32>
    %38 = math.log %19 : vector<8x128xf32>
    %39 = arith.mulf %37, %38 : vector<8x128xf32>
    %40 = arith.mulf %39, %31 : vector<8x128xf32>
    %cst_16 = arith.constant dense<0.000000e+00> : vector<128xf32>
    %41 = vector.multi_reduction <add>, %40, %cst_16 [0] : vector<8x128xf32> to vector<128xf32>
    %42 = vector.shape_cast %41 : vector<128xf32> to vector<1x128xf32>
    %c0_17 = arith.constant 0 : index
    %c0_18 = arith.constant 0 : index
    %43 = vector.load %arg3[%c0_17, %c0_18] : memref<1x128xf32, #tpu.memory_space<vmem>>, vector<1x128xf32>
    tpu.vector_store %arg3[%c0_17, %c0_18], %42 {strides = array<i32>} : memref<1x128xf32, #tpu.memory_space<vmem>>, vector<1x128xf32>,
    return
  }
  func.func @transform_0(%arg0: i32) -> (i32, i32, i32) {
    %c0_i32 = arith.constant 0 : i32
    %c0_i32_0 = arith.constant 0 : i32
    %c0_i32_1 = arith.constant 0 : i32
    return %c0_i32, %arg0, %c0_i32_0 : i32, i32, i32
  }
  func.func @transform_1(%arg0: i32) -> (i32, i32) {
    %c0_i32 = arith.constant 0 : i32
    %c0_i32_0 = arith.constant 0 : i32
    return %arg0, %c0_i32 : i32, i32
  }
  func.func @transform_2(%arg0: i32) -> (i32, i32) {
    %c0_i32 = arith.constant 0 : i32
    %c0_i32_0 = arith.constant 0 : i32
    return %arg0, %c0_i32 : i32, i32
  }
}

</mosaic_0001>

<llo_original>
// kernel: tpu_custom_call.1
$region0: #{tpu_custom_call.1}
  #allocation0 [shape = 'u32[]', space=smem, size = 0x4, offset = 0x4, fixed_abs, tag = 'smem constant byte address 0x4 - core index']
  #allocation1 [shape = 'u32[144,128]{1,0:T(1,128)}', space=vmem, size = 0x12000, scoped, tag = 'internal scratch']
  %s0 = inlined_call_operand.hbm [shape: f32[2,8,128], index: 0, kind: input, shape index: {}]
  %s1 = inlined_call_operand.hbm [shape: s32[8,128], index: 1, kind: input, shape index: {}]
  %s2 = inlined_call_operand.hbm [shape: f32[1,128], index: 2, kind: output, shape index: {}]
  %s3 = sld [smem:[#allocation0]]
  $region26: #{tpu_custom_call.1} parent=0
    _
  %s5 = ssub.s32 1, %s3
  %s6 = scalar_select 0, %s5, %s3
  $region1: #{tpu_custom_call.1} parent=0
    #allocation2 [shape = 'u8[8192]{0}', space=vmem, size = 0x2000, scoped, tag = 'input window, operand 0, single buffered']
    #allocation3 [shape = 's32[1]{0}', space=sflag, size = 0x4, scoped, tag = 'scoped memory for tpu_custom_call.1']
    #allocation4 [shape = 's32[1]{0}', space=sflag, size = 0x4, scoped, tag = 'scoped memory for tpu_custom_call.1']
    #allocation5 [shape = 'u8[4096]{0}', space=vmem, size = 0x1000, scoped, tag = 'input window, operand 1, single buffered']
    #allocation6 [shape = 's32[1]{0}', space=sflag, size = 0x4, scoped, tag = 'scoped memory for tpu_custom_call.1']
    #allocation7 [shape = 'u8[512]{0}', space=vmem, size = 0x400, scoped, tag = 'output window, operand 0, single buffered']
    %7 = vsyncpa [#allocation3], 0
    %8 = vsyncpa [#allocation6], 0
    %9 = vsyncpa [#allocation4], 0
    // Predicated region
    $region2: #{tpu_custom_call.1} parent=1 // pred_check
      _
    $region3: #{tpu_custom_call.1} parent=1 // pred_check_branch
      %11 = sbr.rel (0) target = $region5
    $region4: #{tpu_custom_call.1} parent=1 // pred_region
      %s13 = ssub.s32 256, 256
      %14 = vsyncadd [#allocation3], %s13
      %s15 = sshll.u32 [#allocation2], 4
      %s16 = int_to_ptr.vmem [resolvable:$true] %s15
      %21 = dma.hbm_to_vmem [thread:$0]  %s0, 256, %s16, [#allocation3], 128, 128, 8
    $region5: #{tpu_custom_call.1} parent=1 // pred_fallthru
      _
    // Predicated region
    $region6: #{tpu_custom_call.1} parent=1 // pred_check
      _
    $region7: #{tpu_custom_call.1} parent=1 // pred_check_branch
      %23 = sbr.rel (0) target = $region9
    $region8: #{tpu_custom_call.1} parent=1 // pred_region
      %s25 = ssub.s32 128, 128
      %26 = vsyncadd [#allocation6], %s25
      %s28 = sshll.u32 [#allocation5], 4
      %s29 = int_to_ptr.vmem [resolvable:$true] %s28
      %31 = dma.hbm_to_vmem [thread:$0]  %s1, 128, %s29, [#allocation6]
    $region9: #{tpu_custom_call.1} parent=1 // pred_fallthru
      _
    // Predicated region
    $region10: #{tpu_custom_call.1} parent=1 // pred_check
      _
    $region11: #{tpu_custom_call.1} parent=1 // pred_check_branch
      %33 = sbr.rel (0) target = $region13
    $region12: #{tpu_custom_call.1} parent=1 // pred_region
      %34 = dma.done [#allocation3], 256
    $region13: #{tpu_custom_call.1} parent=1 // pred_fallthru
      _
    // Predicated region
    $region14: #{tpu_custom_call.1} parent=1 // pred_check
      _
    $region15: #{tpu_custom_call.1} parent=1 // pred_check_branch
      %36 = sbr.rel (0) target = $region17
    $region16: #{tpu_custom_call.1} parent=1 // pred_region
      %37 = dma.done [#allocation6], 128
    $region17: #{tpu_custom_call.1} parent=1 // pred_fallthru
      _
    %v38 = vld [vmem:[#allocation5] sm:$0xff]
    %v39 = vld [vmem:[#allocation2] sm:$0xff]
    %s40 = scalar_lea.vmem [#allocation2], 8
    %v41 = vld [vmem:[%s40] sm:$0xff]
    %v42 = vsub.f32 %v41, %v39
    %v43 = vmul.f32 %v42, 1.442695
    %v44 = vpow.pop %v43
    %v45 = vadd.f32 %v44, 1.0
    %v46 = vrcp.pop %v45
    %v47 = vmul.f32 1.0, %v46
    %vm48 = vcmp.eq.s32.totalorder %v38, 0
    %v49 = vsub.f32 1.0, %v47
    %v50 = vsel %vm48, %v47, %v49
    %v51 = vmax.f32 %v50, 1e-06
    %v52 = vmin.f32 %v51, 0.999999
    %vm53 = vcmp.ge.s32.totalorder %v38, 0
    %vm54 = vcmp.lt.s32.totalorder %v38, 2
    %vm55 = vmand %vm53, %vm54
    %v56 = vsel %vm55, 1, 0
    %v57 = vcvt.s32.f32 %v56
    %v58 = vsub.f32 1.0, %v52
    %v59 = vmul.f32 %v58, %v58
    %v60 = vmul.f32 %v59, -0.5
    %v61 = vlog2.pop %v52
    %v62 = vmul.f32 %v61, 0.6931472
    %v63 = vmul.f32 %v60, %v62
    %v64 = vmul.f32 %v63, %v57
    %v65 = vrot.slane %v64, 4
    %v66 = vadd.f32 %v64, %v65
    %v67 = vrot.slane %v66, 2
    %v68 = vadd.f32 %v66, %v67
    %v69 = vrot.slane %v68, 1
    %v70 = vadd.f32 %v68, %v69
    %71 = vst [vmem:[#allocation7] sm:$0x1] %v70
    // Predicated region
    $region18: #{tpu_custom_call.1} parent=1 // pred_check
      _
    $region19: #{tpu_custom_call.1} parent=1 // pred_check_branch
      %73 = sbr.rel (0) target = $region21
    $region20: #{tpu_custom_call.1} parent=1 // pred_region
      %s75 = ssub.s32 16, 16
      %76 = vsyncadd [#allocation4], %s75
      %s78 = sshll.u32 [#allocation7], 4
      %s79 = int_to_ptr.vmem [resolvable:$true] %s78
      %81 = dma.vmem_to_hbm [thread:$0]  %s79, 16, %s2, [#allocation4]
    $region21: #{tpu_custom_call.1} parent=1 // pred_fallthru
      _
    // Predicated region
    $region22: #{tpu_custom_call.1} parent=1 // pred_check
      _
    $region23: #{tpu_custom_call.1} parent=1 // pred_check_branch
      %83 = sbr.rel (0) target = $region25
    $region24: #{tpu_custom_call.1} parent=1 // pred_region
      %84 = dma.done [#allocation4], 16
    $region25: #{tpu_custom_call.1} parent=1 // pred_fallthru
      _
    %85 = vsyncpa [#allocation3], 1
    %86 = vsyncpa [#allocation6], 1
    %87 = vsyncpa [#allocation4], 1

</llo_original>
